<compile_context>
chip_gen: v5e
topology: v5e:2x2
jax: 0.10.0
libtpu: 0.0.40
codegen_flags: <defaults>
</compile_context>

<pallas_src>
import jax
import jax.numpy as jnp
from jax.experimental import pallas as pl
from jax.experimental.pallas import tpu as pltpu


def _leaky_relu(x, negative_slope=0.01):
    return jnp.where(x >= 0, x, negative_slope * x)


def _round_up(a, m):
    return ((a + m - 1) // m) * m


def mlp_kernel(x_ref, w1_ref, b1_ref, w2_ref, b2_ref, w3_ref, b3_ref, o_ref):
    hp = jax.lax.Precision.HIGHEST
    # Cast the streamed x tile to the weights' compute dtype in-kernel (HBM-neutral).
    x = x_ref[...].astype(w1_ref.dtype)
    # fc1 + leaky_relu (MXU, f32 accumulation)
    h1 = jnp.dot(x, w1_ref[...], precision=hp, preferred_element_type=jnp.float32)
    h1 = _leaky_relu(h1 + b1_ref[...])
    # fc2 + leaky_relu
    h2 = jnp.dot(h1.astype(w2_ref.dtype), w2_ref[...],
                 precision=hp, preferred_element_type=jnp.float32)
    h2 = _leaky_relu(h2 + b2_ref[...])
    # fc5 (32 -> 1): dot_general with M=1, K=32, N=tb produces the (1, tb) row
    # directly lane-major from the MXU (no sublane->lane relayout, no masked stores).
    out_row = jax.lax.dot_general(
        w3_ref[...].astype(jnp.float32), h2,
        dimension_numbers=(((1,), (1,)), ((), ())),
        precision=hp, preferred_element_type=jnp.float32)          # (1, tb)
    o_ref[...] = (out_row + b3_ref[...])[None].astype(o_ref.dtype)  # (1, 1, tb)


def _choose_tb(B, input_size, x_itemsize):
    """Pick the batch-tile size tb (rows per grid step)."""
    if B <= 128:
        return _round_up(max(B, 1), 8)
    # HBM amortization: target ~2 MiB of streamed x per grid step so the ~0.35 us
    # per-step pipeline overhead is negligible.
    tb_hbm = (2 << 20) // max(1, input_size * x_itemsize)
    # VMEM budget (~24 MiB; fits v5e/v6e/v7x with headroom), counting the 128-lane
    # padding of the x tile and the (tb,128)-padded f32 h1/h2 intermediates.
    per_row = (2 * _round_up(input_size, 128) * x_itemsize   # x (double buffered)
               + 2 * 128 * 4                                  # h1 + h2 (f32, lane padded)
               + 2 * 8 * 4)                                   # output block (double buffered)
    tb_vmem = (24 << 20) // per_row
    # Give both v7x TensorCores at least one grid tile when B allows it.
    tb_2core = _round_up(pl.cdiv(B, 2), 128)
    tb = max(128, min(tb_hbm, tb_vmem, tb_2core, (B // 128) * 128))
    return (tb // 128) * 128


def regression_nn_forward(x, params, *, block_b=None, compute_dtype=jnp.float32):
    """Forward pass of RegressionNN.  x: (B, input_size) -> (B, 1) float32.

    block_b: optional manual batch-tile override (auto-sized otherwise).
    compute_dtype: dtype of the fc1/fc2 weights on the MXU (f32 or bf16).  x is
    streamed in its stored dtype and cast in-kernel; to actually cut x HBM traffic
    in half, pass x already stored as bf16.
    """
    w1, b1, w2, b2, w3, b3 = params
    B, input_size = x.shape
    x_itemsize = jnp.dtype(x.dtype).itemsize

    if block_b is not None:
        tb = _round_up(min(int(block_b), _round_up(B, 8)), 8)
        if B >= 128 and tb >= 128:
            tb = _round_up(tb, 128)
    else:
        tb = _choose_tb(B, input_size, x_itemsize)

    num_tiles = pl.cdiv(B, tb)
    # Only the degenerate single-tile-larger-than-B case pads, and only the tail
    # (< 128 rows).  Multi-tile grids use a partial edge block instead: OOB rows
    # read unspecified data but are discarded by the final [:B] slice.
    if tb > B:
        x = jnp.pad(x, ((0, tb - B), (0, 0)))

    # Weights/biases: tiny, VMEM-resident across grid steps (constant index_maps).
    w1c = w1.astype(compute_dtype)
    w2c = w2.astype(compute_dtype)
    w3_row = w3.reshape(1, -1).astype(jnp.float32)   # (1, 32), fc5 stays f32
    b1c = b1.astype(jnp.float32)
    b2c = b2.astype(jnp.float32)
    b3c = b3.reshape(1, 1).astype(jnp.float32)

    def const_spec(shape):
        return pl.BlockSpec(shape, lambda i: (0,) * len(shape))

    # VMEM footprint estimate (lane-padded) -> explicit scoped-VMEM limit.
    vmem_estimate = (2 * tb * _round_up(input_size, 128) * x_itemsize  # x double-buffer
                     + 2 * tb * 128 * 4                                # h1 + h2
                     + 2 * 8 * tb * 4                                  # out double-buffer
                     + (2 << 20))                                      # weights + headroom
    vmem_limit = int(min(max(vmem_estimate, 32 << 20), 56 << 20))

    w_itemsize = jnp.dtype(compute_dtype).itemsize
    flops = 2 * B * (input_size * 32 + 32 * 32 + 32)
    bytes_accessed = (x.size * x_itemsize
                      + (w1c.size + w2c.size) * w_itemsize
                      + (w3_row.size + b1c.size + b2c.size + b3c.size) * 4
                      + B * 4)

    out_slab = pl.pallas_call(
        mlp_kernel,
        out_shape=jax.ShapeDtypeStruct((num_tiles, 1, tb), jnp.float32),
        grid=(num_tiles,),
        in_specs=[
            pl.BlockSpec((tb, input_size), lambda i: (i, 0)),   # x: streamed tiles
            const_spec(w1c.shape),                              # weights/biases: resident
            const_spec(b1c.shape),
            const_spec(w2c.shape),
            const_spec(b2c.shape),
            const_spec(w3_row.shape),
            const_spec(b3c.shape),
        ],
        out_specs=pl.BlockSpec((1, 1, tb), lambda i: (i, 0, 0)),
        compiler_params=pltpu.CompilerParams(
            dimension_semantics=("parallel",),
            vmem_limit_bytes=vmem_limit,
        ),
        cost_estimate=pl.CostEstimate(
            flops=flops, transcendentals=0, bytes_accessed=bytes_accessed),
    )(x, w1c, b1c, w2c, b2c, w3_row, b3c)

    # Lane-dense slab -> (B, 1) column (row-major: slab[i, 0, j] = row i*tb + j).
    return out_slab.reshape(num_tiles * tb, 1)[:B]


def init_params(key, input_size):
    # Mirrors RegressionNN.__init__: kaiming_normal_ (fan_in, leaky_relu) for fc1/fc2
    # weights, PyTorch default init for fc5 weight and all biases.  Weights are stored
    # pre-transposed as (in_features, out_features).
    k1, k2, k3, k4, k5, k6 = jax.random.split(key, 6)
    gain = (2.0 / (1.0 + 0.01 ** 2)) ** 0.5

    def kaiming(k, fan_in, fan_out):
        std = gain / (fan_in ** 0.5)
        return std * jax.random.normal(k, (fan_in, fan_out), dtype=jnp.float32)

    def linear_default_bias(k, fan_in, fan_out):
        bound = 1.0 / (fan_in ** 0.5)
        return jax.random.uniform(k, (1, fan_out), dtype=jnp.float32,
                                  minval=-bound, maxval=bound)

    def linear_default_weight(k, fan_in, fan_out):
        bound = 1.0 / (fan_in ** 0.5)
        return jax.random.uniform(k, (fan_in, fan_out), dtype=jnp.float32,
                                  minval=-bound, maxval=bound)

    w1 = kaiming(k1, input_size, 32)             # fc1.weight (transposed layout)
    b1 = linear_default_bias(k2, input_size, 32)
    w2 = kaiming(k3, 32, 32)                     # fc2.weight
    b2 = linear_default_bias(k4, 32, 32)
    w3 = linear_default_weight(k5, 32, 1)        # fc5.weight (default init)
    b3 = linear_default_bias(k6, 32, 1)
    return (w1, b1, w2, b2, w3, b3)


def _reference(x, params):
    hp = jax.lax.Precision.HIGHEST
    w1, b1, w2, b2, w3, b3 = params
    h = jnp.dot(x, w1, precision=hp) + b1
    h = jnp.where(h >= 0, h, 0.01 * h)
    h = jnp.dot(h, w2, precision=hp) + b2
    h = jnp.where(h >= 0, h, 0.01 * h)
    return jnp.dot(h, w3, precision=hp) + b3


if __name__ == "__main__":
    key = jax.random.PRNGKey(0)
    kx, kp = jax.random.split(key)

    input_size = 16
    params = init_params(kp, input_size)

    # 1) Tiny batch, single tile (auto tb).
    x = jax.random.normal(kx, (8, input_size), dtype=jnp.float32)
    out = regression_nn_forward(x, params)
    jax.block_until_ready(out)
    assert out.shape == (8, 1)
    assert jnp.allclose(out, _reference(x, params), atol=1e-4, rtol=1e-4)

    # 2) Ragged batch + forced small tile -> multi-tile grid with a partial edge
    #    block (exercises the no-host-pad pipelined path).
    x2 = jax.random.normal(jax.random.PRNGKey(1), (37, input_size), dtype=jnp.float32)
    out2 = regression_nn_forward(x2, params, block_b=8)
    jax.block_until_ready(out2)
    assert out2.shape == (37, 1)
    assert jnp.allclose(out2, _reference(x2, params), atol=1e-4, rtol=1e-4)

    # 3) Moderate batch, auto tile sizing (128-multiple lane-dense tiles, partial
    #    edge block, two grid tiles so both v7x TensorCores get work).
    x3 = jax.random.normal(jax.random.PRNGKey(2), (300, input_size), dtype=jnp.float32)
    out3 = regression_nn_forward(x3, params)
    jax.block_until_ready(out3)
    assert out3.shape == (300, 1)
    assert jnp.allclose(out3, _reference(x3, params), atol=1e-4, rtol=1e-4)

    # 4) bf16 weight/compute path (x stays f32 in HBM; cast happens in-kernel).
    out4 = regression_nn_forward(x3, params, compute_dtype=jnp.bfloat16)
    jax.block_until_ready(out4)
    assert jnp.allclose(out4, _reference(x3, params), atol=1e-1, rtol=1e-1)

    print("KERNEL_OK")
</pallas_src>

<mosaic_0001>
module attributes {stable_mosaic.version = 11 : i64} {
  func.func @mlp_kernel(%arg0: i32, %arg1: memref<8x16xf32, #tpu.memory_space<vmem>>, %arg2: memref<16x32xf32, #tpu.memory_space<vmem>>, %arg3: memref<1x32xf32, #tpu.memory_space<vmem>>, %arg4: memref<32x32xf32, #tpu.memory_space<vmem>>, %arg5: memref<1x32xf32, #tpu.memory_space<vmem>>, %arg6: memref<1x32xf32, #tpu.memory_space<vmem>>, %arg7: memref<1x1xf32, #tpu.memory_space<vmem>>, %arg8: memref<1x1x8xf32, #tpu.memory_space<vmem>>) attributes {dimension_semantics = [#tpu.dimension_semantics<parallel>], iteration_bounds = array<i64: 1>, scalar_prefetch = 0 : i64, scratch_operands = 0 : i64, tpu.core_type = #tpu.core_type<tc>, window_params = [{transform_indices = @transform_0, window_bounds = array<i64: 8, 16>}, {pipeline_mode = #tpu.pipeline_mode<synchronous>, transform_indices = @transform_1, window_bounds = array<i64: 16, 32>}, {pipeline_mode = #tpu.pipeline_mode<synchronous>, transform_indices = @transform_2, window_bounds = array<i64: 1, 32>}, {pipeline_mode = #tpu.pipeline_mode<synchronous>, transform_indices = @transform_3, window_bounds = array<i64: 32, 32>}, {pipeline_mode = #tpu.pipeline_mode<synchronous>, transform_indices = @transform_4, window_bounds = array<i64: 1, 32>}, {pipeline_mode = #tpu.pipeline_mode<synchronous>, transform_indices = @transform_5, window_bounds = array<i64: 1, 32>}, {pipeline_mode = #tpu.pipeline_mode<synchronous>, transform_indices = @transform_6, window_bounds = array<i64: 1, 1>}, {transform_indices = @transform_7, window_bounds = array<i64: 1, 1, 8>}]} {
    %c0 = arith.constant 0 : index
    %c0_0 = arith.constant 0 : index
    %0 = vector.load %arg1[%c0, %c0_0] : memref<8x16xf32, #tpu.memory_space<vmem>>, vector<8x16xf32>
    %c0_1 = arith.constant 0 : index
    %c0_2 = arith.constant 0 : index
    %1 = vector.load %arg2[%c0_1, %c0_2] : memref<16x32xf32, #tpu.memory_space<vmem>>, vector<16x32xf32>
    %cst = arith.constant dense<0.000000e+00> : vector<8x32xf32>
    %2 = tpu.matmul %0, %1, %cst {dimension_numbers = #tpu.dot_dimension_numbers<[1], [0], [0], [1], [0, 0, 1, 1], [], []>, precision = #tpu.contract_precision<fp32>} : vector<8x16xf32>, vector<16x32xf32>, vector<8x32xf32> -> vector<8x32xf32>
    %c0_3 = arith.constant 0 : index
    %c0_4 = arith.constant 0 : index
    %3 = vector.load %arg3[%c0_3, %c0_4] : memref<1x32xf32, #tpu.memory_space<vmem>>, vector<1x32xf32>
    %4 = vector.broadcast %3 : vector<1x32xf32> to vector<8x32xf32>
    %5 = arith.addf %2, %4 : vector<8x32xf32>
    %cst_5 = arith.constant 0.000000e+00 : f32
    %6 = vector.broadcast %cst_5 : f32 to vector<8x32xf32>
    %7 = arith.cmpf oge, %5, %6 : vector<8x32xf32>
    %cst_6 = arith.constant 0.00999999977 : f32
    %8 = vector.broadcast %cst_6 : f32 to vector<8x32xf32>
    %9 = arith.mulf %8, %5 : vector<8x32xf32>
    %10 = arith.select %7, %5, %9 : vector<8x32xi1>, vector<8x32xf32>
    %c0_7 = arith.constant 0 : index
    %c0_8 = arith.constant 0 : index
    %11 = vector.load %arg4[%c0_7, %c0_8] : memref<32x32xf32, #tpu.memory_space<vmem>>, vector<32x32xf32>
    %cst_9 = arith.constant dense<0.000000e+00> : vector<8x32xf32>
    %12 = tpu.matmul %10, %11, %cst_9 {dimension_numbers = #tpu.dot_dimension_numbers<[1], [0], [0], [1], [0, 0, 1, 1], [], []>, precision = #tpu.contract_precision<fp32>} : vector<8x32xf32>, vector<32x32xf32>, vector<8x32xf32> -> vector<8x32xf32>
    %c0_10 = arith.constant 0 : index
    %c0_11 = arith.constant 0 : index
    %13 = vector.load %arg5[%c0_10, %c0_11] : memref<1x32xf32, #tpu.memory_space<vmem>>, vector<1x32xf32>
    %14 = vector.broadcast %13 : vector<1x32xf32> to vector<8x32xf32>
    %15 = arith.addf %12, %14 : vector<8x32xf32>
    %cst_12 = arith.constant 0.000000e+00 : f32
    %16 = vector.broadcast %cst_12 : f32 to vector<8x32xf32>
    %17 = arith.cmpf oge, %15, %16 : vector<8x32xf32>
    %cst_13 = arith.constant 0.00999999977 : f32
    %18 = vector.broadcast %cst_13 : f32 to vector<8x32xf32>
    %19 = arith.mulf %18, %15 : vector<8x32xf32>
    %20 = arith.select %17, %15, %19 : vector<8x32xi1>, vector<8x32xf32>
    %c0_14 = arith.constant 0 : index
    %c0_15 = arith.constant 0 : index
    %21 = vector.load %arg6[%c0_14, %c0_15] : memref<1x32xf32, #tpu.memory_space<vmem>>, vector<1x32xf32>
    %cst_16 = arith.constant dense<0.000000e+00> : vector<1x8xf32>
    %22 = tpu.matmul %21, %20, %cst_16 {dimension_numbers = #tpu.dot_dimension_numbers<[1], [1], [0], [0], [0, 0, 1, 0], [], []>, precision = #tpu.contract_precision<fp32>} : vector<1x32xf32>, vector<8x32xf32>, vector<1x8xf32> -> vector<1x8xf32>
    %c0_17 = arith.constant 0 : index
    %c0_18 = arith.constant 0 : index
    %23 = vector.load %arg7[%c0_17, %c0_18] : memref<1x1xf32, #tpu.memory_space<vmem>>, vector<1x1xf32>
    %24 = vector.broadcast %23 : vector<1x1xf32> to vector<1x8xf32>
    %25 = arith.addf %22, %24 : vector<1x8xf32>
    %26 = vector.shape_cast %25 : vector<1x8xf32> to vector<1x1x8xf32>
    %c0_19 = arith.constant 0 : index
    %c0_20 = arith.constant 0 : index
    %c0_21 = arith.constant 0 : index
    %27 = vector.load %arg8[%c0_19, %c0_20, %c0_21] : memref<1x1x8xf32, #tpu.memory_space<vmem>>, vector<1x1x8xf32>
    tpu.vector_store %arg8[%c0_19, %c0_20, %c0_21], %26 {strides = array<i32>} : memref<1x1x8xf32, #tpu.memory_space<vmem>>, vector<1x1x8xf32>,
    return
  }
  func.func @transform_0(%arg0: i32) -> (i32, i32) {
    %c0_i32 = arith.constant 0 : i32
    %c0_i32_0 = arith.constant 0 : i32
    return %arg0, %c0_i32 : i32, i32
  }
  func.func @transform_1(%arg0: i32) -> (i32, i32) {
    %c0_i32 = arith.constant 0 : i32
    %c0_i32_0 = arith.constant 0 : i32
    %c0_i32_1 = arith.constant 0 : i32
    return %c0_i32, %c0_i32_0 : i32, i32
  }
  func.func @transform_2(%arg0: i32) -> (i32, i32) {
    %c0_i32 = arith.constant 0 : i32
    %c0_i32_0 = arith.constant 0 : i32
    %c0_i32_1 = arith.constant 0 : i32
    return %c0_i32, %c0_i32_0 : i32, i32
  }
  func.func @transform_3(%arg0: i32) -> (i32, i32) {
    %c0_i32 = arith.constant 0 : i32
    %c0_i32_0 = arith.constant 0 : i32
    %c0_i32_1 = arith.constant 0 : i32
    return %c0_i32, %c0_i32_0 : i32, i32
  }
  func.func @transform_4(%arg0: i32) -> (i32, i32) {
    %c0_i32 = arith.constant 0 : i32
    %c0_i32_0 = arith.constant 0 : i32
    %c0_i32_1 = arith.constant 0 : i32
    return %c0_i32, %c0_i32_0 : i32, i32
  }
  func.func @transform_5(%arg0: i32) -> (i32, i32) {
    %c0_i32 = arith.constant 0 : i32
    %c0_i32_0 = arith.constant 0 : i32
    %c0_i32_1 = arith.constant 0 : i32
    return %c0_i32, %c0_i32_0 : i32, i32
  }
  func.func @transform_6(%arg0: i32) -> (i32, i32) {
    %c0_i32 = arith.constant 0 : i32
    %c0_i32_0 = arith.constant 0 : i32
    %c0_i32_1 = arith.constant 0 : i32
    return %c0_i32, %c0_i32_0 : i32, i32
  }
  func.func @transform_7(%arg0: i32) -> (i32, i32, i32) {
    %c0_i32 = arith.constant 0 : i32
    %c0_i32_0 = arith.constant 0 : i32
    %c0_i32_1 = arith.constant 0 : i32
    return %arg0, %c0_i32, %c0_i32_0 : i32, i32, i32
  }
}

</mosaic_0001>

<llo_original>
// kernel: tpu_custom_call.1
$region0: #{tpu_custom_call.1}
  #allocation0 [shape = 'u32[]', space=smem, size = 0x4, offset = 0x4, fixed_abs, tag = 'smem constant byte address 0x4 - core index']
  #allocation1 [shape = 'u32[72,128]{1,0:T(1,128)}', space=vmem, size = 0x9000, scoped, tag = 'internal scratch']
  #allocation2 [shape = 'f32[1,1]{1,0:T(1,128)S(1)}', space=vmem, size = 0x200, scoped, tag = 'scoped memory for tpu_custom_call.1']
  %s0 = inlined_call_operand.hbm [shape: f32[8,16], index: 0, kind: input, shape index: {}]
  %s1 = inlined_call_operand.hbm [shape: f32[16,32], index: 1, kind: input, shape index: {}]
  %s2 = inlined_call_operand.vmem [shape: f32[1,32], index: 2, kind: input, shape index: {}]
  %s3 = inlined_call_operand.hbm [shape: f32[32,32], index: 3, kind: input, shape index: {}]
  %s4 = inlined_call_operand.vmem [shape: f32[1,32], index: 4, kind: input, shape index: {}]
  %s5 = inlined_call_operand.vmem [shape: f32[1,32], index: 5, kind: input, shape index: {}]
  %s6 = inlined_call_operand.<no memory space> [shape: f32[1,1], index: 6, kind: input, shape index: {}]
  %s7 = inlined_call_operand.hbm [shape: f32[1,1,8], index: 7, kind: output, shape index: {}]
  %s8 = sld [smem:[#allocation0]]
  $region50: #{tpu_custom_call.1} parent=0
    _
  %s10 = ssub.s32 1, %s8
  %s11 = scalar_select 0, %s10, %s8
  %v12 = vstv %s6
  %13 = vst [vmem:[#allocation2] sm:$0x1] %v12
  $region1: #{tpu_custom_call.1} parent=0
    #allocation3 [shape = 'u8[4096]{0}', space=vmem, size = 0x1000, scoped, tag = 'input window, operand 0, single buffered']
    #allocation4 [shape = 's32[1]{0}', space=sflag, size = 0x4, scoped, tag = 'scoped memory for tpu_custom_call.1']
    #allocation5 [shape = 's32[1]{0}', space=sflag, size = 0x4, scoped, tag = 'scoped memory for tpu_custom_call.1']
    #allocation6 [shape = 'u8[8192]{0}', space=vmem, size = 0x2000, scoped, tag = 'input window, operand 1, single buffered']
    #allocation7 [shape = 's32[1]{0}', space=sflag, size = 0x4, scoped, tag = 'scoped memory for tpu_custom_call.1']
    #allocation8 [shape = 'u8[16384]{0}', space=vmem, size = 0x4000, scoped, tag = 'input window, operand 3, single buffered']
    #allocation9 [shape = 'u8[512]{0}', space=vmem, size = 0x400, scoped, tag = 'output window, operand 0, single buffered']
    %14 = vsyncpa [#allocation4], 0
    %15 = vsyncpa [#allocation7], 0
    %16 = vsyncpa [#allocation5], 0
    // Predicated region
    $region2: #{tpu_custom_call.1} parent=1 // pred_check
      _
    $region3: #{tpu_custom_call.1} parent=1 // pred_check_branch
      %18 = sbr.rel (0) target = $region5
    $region4: #{tpu_custom_call.1} parent=1 // pred_region
      %20 = vsyncadd [#allocation4], 0
      %s22 = sshll.u32 %s0, 4
      %s23 = int_to_ptr.hbm [resolvable:$true] %s22
      %s24 = sshll.u32 [#allocation3], 4
      %s25 = int_to_ptr.vmem [resolvable:$true] %s24
      %27 = dma.hbm_to_vmem [thread:$0]  %s23, 128, %s25, [#allocation4]
    $region5: #{tpu_custom_call.1} parent=1 // pred_fallthru
      _
    // Predicated region
    $region6: #{tpu_custom_call.1} parent=1 // pred_check
      _
    $region7: #{tpu_custom_call.1} parent=1 // pred_check_branch
      %29 = sbr.rel (0) target = $region9
    $region8: #{tpu_custom_call.1} parent=1 // pred_region
      %31 = vsyncadd [#allocation7], 0
      %s32 = sshll.u32 %s1, 4
      %s33 = int_to_ptr.hbm [resolvable:$true] %s32
      %s34 = sshll.u32 [#allocation6], 4
      %s35 = int_to_ptr.vmem [resolvable:$true] %s34
      %40 = dma.hbm_to_vmem [thread:$0]  %s33, 256, %s35, [#allocation7], 128, 128, 8
    $region9: #{tpu_custom_call.1} parent=1 // pred_fallthru
      _
    // Predicated region
    $region10: #{tpu_custom_call.1} parent=1 // pred_check
      _
    $region11: #{tpu_custom_call.1} parent=1 // pred_check_branch
      %42 = sbr.rel (0) target = $region13
    $region12: #{tpu_custom_call.1} parent=1 // pred_region
      _
    $region13: #{tpu_custom_call.1} parent=1 // pred_fallthru
      _
    // Predicated region
    $region14: #{tpu_custom_call.1} parent=1 // pred_check
      _
    $region15: #{tpu_custom_call.1} parent=1 // pred_check_branch
      %44 = sbr.rel (0) target = $region17
    $region16: #{tpu_custom_call.1} parent=1 // pred_region
      %46 = vsyncadd [#allocation7], 0
      %s47 = sshll.u32 %s3, 4
      %s48 = int_to_ptr.hbm [resolvable:$true] %s47
      %s49 = sshll.u32 [#allocation8], 4
      %s50 = int_to_ptr.vmem [resolvable:$true] %s49
      %55 = dma.hbm_to_vmem [thread:$0]  %s48, 512, %s50, [#allocation7], 128, 128, 8
    $region17: #{tpu_custom_call.1} parent=1 // pred_fallthru
      _
    // Predicated region
    $region18: #{tpu_custom_call.1} parent=1 // pred_check
      _
    $region19: #{tpu_custom_call.1} parent=1 // pred_check_branch
      %57 = sbr.rel (0) target = $region21
    $region20: #{tpu_custom_call.1} parent=1 // pred_region
      _
    $region21: #{tpu_custom_call.1} parent=1 // pred_fallthru
      _
    // Predicated region
    $region22: #{tpu_custom_call.1} parent=1 // pred_check
      _
    $region23: #{tpu_custom_call.1} parent=1 // pred_check_branch
      %59 = sbr.rel (0) target = $region25
    $region24: #{tpu_custom_call.1} parent=1 // pred_region
      _
    $region25: #{tpu_custom_call.1} parent=1 // pred_fallthru
      _
    // Predicated region
    $region26: #{tpu_custom_call.1} parent=1 // pred_check
      _
    $region27: #{tpu_custom_call.1} parent=1 // pred_check_branch
      %61 = sbr.rel (0) target = $region29
    $region28: #{tpu_custom_call.1} parent=1 // pred_region
      _
    $region29: #{tpu_custom_call.1} parent=1 // pred_fallthru
      _
    // Predicated region
    $region30: #{tpu_custom_call.1} parent=1 // pred_check
      _
    $region31: #{tpu_custom_call.1} parent=1 // pred_check_branch
      %63 = sbr.rel (0) target = $region33
    $region32: #{tpu_custom_call.1} parent=1 // pred_region
      %65 = dma.done [#allocation4], 128
    $region33: #{tpu_custom_call.1} parent=1 // pred_fallthru
      _
    // Predicated region
    $region34: #{tpu_custom_call.1} parent=1 // pred_check
      _
    $region35: #{tpu_custom_call.1} parent=1 // pred_check_branch
      %67 = sbr.rel (0) target = $region37
    $region36: #{tpu_custom_call.1} parent=1 // pred_region
      %69 = dma.done [#allocation7], 256
    $region37: #{tpu_custom_call.1} parent=1 // pred_fallthru
      _
    // Predicated region
    $region38: #{tpu_custom_call.1} parent=1 // pred_check
      _
    $region39: #{tpu_custom_call.1} parent=1 // pred_check_branch
      %71 = sbr.rel (0) target = $region41
    $region40: #{tpu_custom_call.1} parent=1 // pred_region
      %73 = dma.done [#allocation7], 512
    $region41: #{tpu_custom_call.1} parent=1 // pred_fallthru
      _
    %v74 = vld [vmem:[#allocation3] sm:$0xff]
    %v75 = vld [vmem:[#allocation6] sm:$0xff]
    %v76 = vld [vmem:[#allocation6 + $0x8] sm:$0xff]
    %v77 = vld [vmem:[%s2] sm:$0x1]
    %v79 = vperm.slane %v77, 0
    %vm81 = vcmask 130048
    %v83 = vsel %vm81, %v74, 0
    %85 = vmatpush.msra.mxu0 0.0
    %86 = vmatpush.msra.mxu0 0.0
    %87 = vmatpush.msra.mxu0 0.0
    %88 = vmatpush.msra.mxu0 0.0
    %89 = vmatpush.msra.mxu0 0.0
    %90 = vmatpush.msra.mxu0 0.0
    %91 = vmatpush.msra.mxu0 0.0
    %92 = vmatpush.msra.mxu0 0.0
    %93 = vmatpush.msra.mxu0 0.0
    %94 = vmatpush.msra.mxu0 0.0
    %95 = vmatpush.msra.mxu0 0.0
    %96 = vmatpush.msra.mxu0 0.0
    %97 = vmatpush.msra.mxu0 0.0
    %98 = vmatpush.msra.mxu0 0.0
    %v99 = vand.u32 %v76, 4294901760
    %100 = vmatpush.msra.mxu0 %v99
    %v101 = vand.u32 %v75, 4294901760
    %102 = vmatpush.msra.mxu0 %v101
    %v103 = vand.u32 %v83, 4294901760
    %v104 = vsub.f32 %v83, %v103
    %v105 = vand.u32 %v104, 4294901760
    %v106 = vsub.f32 %v104, %v105
    %v107 = vand.u32 %v106, 4294901760
    %108 = vmatmul.f32.gmra.mxu0 %v107
    %v109 = vpop.f32.mrf.mxu0
    %v110 = vadd.f32 %v79, %v109
    %111 = vdwg.mxu0
    %112 = vmatpush.msra.mxu0 0.0
    %113 = vmatpush.msra.mxu0 0.0
    %114 = vmatpush.msra.mxu0 0.0
    %115 = vmatpush.msra.mxu0 0.0
    %116 = vmatpush.msra.mxu0 0.0
    %117 = vmatpush.msra.mxu0 0.0
    %118 = vmatpush.msra.mxu0 0.0
    %119 = vmatpush.msra.mxu0 0.0
    %120 = vmatpush.msra.mxu0 0.0
    %121 = vmatpush.msra.mxu0 0.0
    %122 = vmatpush.msra.mxu0 0.0
    %123 = vmatpush.msra.mxu0 0.0
    %124 = vmatpush.msra.mxu0 0.0
    %125 = vmatpush.msra.mxu0 0.0
    %v126 = vand.u32 %v76, 4294901760
    %v127 = vsub.f32 %v76, %v126
    %v128 = vand.u32 %v127, 4294901760
    %v129 = vsub.f32 %v127, %v128
    %v130 = vand.u32 %v129, 4294901760
    %131 = vmatpush.msra.mxu0 %v130
    %v132 = vand.u32 %v75, 4294901760
    %v133 = vsub.f32 %v75, %v132
    %v134 = vand.u32 %v133, 4294901760
    %v135 = vsub.f32 %v133, %v134
    %v136 = vand.u32 %v135, 4294901760
    %137 = vmatpush.msra.mxu0 %v136
    %v138 = vand.u32 %v83, 4294901760
    %139 = vmatmul.f32.gmra.mxu0 %v138
    %v140 = vpop.f32.mrf.mxu0
    %v141 = vadd.f32 %v110, %v140
    %142 = vdwg.mxu0
    %143 = vmatpush.msra.mxu0 0.0
    %144 = vmatpush.msra.mxu0 0.0
    %145 = vmatpush.msra.mxu0 0.0
    %146 = vmatpush.msra.mxu0 0.0
    %147 = vmatpush.msra.mxu0 0.0
    %148 = vmatpush.msra.mxu0 0.0
    %149 = vmatpush.msra.mxu0 0.0
    %150 = vmatpush.msra.mxu0 0.0
    %151 = vmatpush.msra.mxu0 0.0
    %152 = vmatpush.msra.mxu0 0.0
    %153 = vmatpush.msra.mxu0 0.0
    %154 = vmatpush.msra.mxu0 0.0
    %155 = vmatpush.msra.mxu0 0.0
    %156 = vmatpush.msra.mxu0 0.0
    %v157 = vand.u32 %v76, 4294901760
    %v158 = vsub.f32 %v76, %v157
    %159 = vmatpush.msra.mxu0 %v158
    %v160 = vand.u32 %v75, 4294901760
    %v161 = vsub.f32 %v75, %v160
    %162 = vmatpush.msra.mxu0 %v161
    %v163 = vand.u32 %v83, 4294901760
    %v164 = vsub.f32 %v83, %v163
    %165 = vmatmul.f32.gmra.mxu0 %v164
    %v166 = vpop.f32.mrf.mxu0
    %v167 = vadd.f32 %v141, %v166
    %168 = vdwg.mxu0
    %169 = vmatpush.msra.mxu0 0.0
    %170 = vmatpush.msra.mxu0 0.0
    %171 = vmatpush.msra.mxu0 0.0
    %172 = vmatpush.msra.mxu0 0.0
    %173 = vmatpush.msra.mxu0 0.0
    %174 = vmatpush.msra.mxu0 0.0
    %175 = vmatpush.msra.mxu0 0.0
    %176 = vmatpush.msra.mxu0 0.0
    %177 = vmatpush.msra.mxu0 0.0
    %178 = vmatpush.msra.mxu0 0.0
    %179 = vmatpush.msra.mxu0 0.0
    %180 = vmatpush.msra.mxu0 0.0
    %181 = vmatpush.msra.mxu0 0.0
    %182 = vmatpush.msra.mxu0 0.0
    %v183 = vand.u32 %v76, 4294901760
    %184 = vmatpush.msra.mxu0 %v183
    %v185 = vand.u32 %v75, 4294901760
    %186 = vmatpush.msra.mxu0 %v185
    %v187 = vand.u32 %v83, 4294901760
    %v188 = vsub.f32 %v83, %v187
    %v189 = vand.u32 %v188, 4294901760
    %190 = vmatmul.f32.gmra.mxu0 %v189
    %v191 = vpop.f32.mrf.mxu0
    %v192 = vadd.f32 %v167, %v191
    %193 = vdwg.mxu0
    %194 = vmatpush.msra.mxu0 0.0
    %195 = vmatpush.msra.mxu0 0.0
    %196 = vmatpush.msra.mxu0 0.0
    %197 = vmatpush.msra.mxu0 0.0
    %198 = vmatpush.msra.mxu0 0.0
    %199 = vmatpush.msra.mxu0 0.0
    %200 = vmatpush.msra.mxu0 0.0
    %201 = vmatpush.msra.mxu0 0.0
    %202 = vmatpush.msra.mxu0 0.0
    %203 = vmatpush.msra.mxu0 0.0
    %204 = vmatpush.msra.mxu0 0.0
    %205 = vmatpush.msra.mxu0 0.0
    %206 = vmatpush.msra.mxu0 0.0
    %207 = vmatpush.msra.mxu0 0.0
    %v208 = vand.u32 %v76, 4294901760
    %v209 = vsub.f32 %v76, %v208
    %v210 = vand.u32 %v209, 4294901760
    %211 = vmatpush.msra.mxu0 %v210
    %v212 = vand.u32 %v75, 4294901760
    %v213 = vsub.f32 %v75, %v212
    %v214 = vand.u32 %v213, 4294901760
    %215 = vmatpush.msra.mxu0 %v214
    %v216 = vand.u32 %v83, 4294901760
    %217 = vmatmul.f32.gmra.mxu0 %v216
    %v218 = vpop.f32.mrf.mxu0
    %v219 = vadd.f32 %v192, %v218
    %220 = vdwg.mxu0
    %221 = vmatpush.msra.mxu0 0.0
    %222 = vmatpush.msra.mxu0 0.0
    %223 = vmatpush.msra.mxu0 0.0
    %224 = vmatpush.msra.mxu0 0.0
    %225 = vmatpush.msra.mxu0 0.0
    %226 = vmatpush.msra.mxu0 0.0
    %227 = vmatpush.msra.mxu0 0.0
    %228 = vmatpush.msra.mxu0 0.0
    %229 = vmatpush.msra.mxu0 0.0
    %230 = vmatpush.msra.mxu0 0.0
    %231 = vmatpush.msra.mxu0 0.0
    %232 = vmatpush.msra.mxu0 0.0
    %233 = vmatpush.msra.mxu0 0.0
    %234 = vmatpush.msra.mxu0 0.0
    %v235 = vand.u32 %v76, 4294901760
    %236 = vmatpush.msra.mxu0 %v235
    %v237 = vand.u32 %v75, 4294901760
    %238 = vmatpush.msra.mxu0 %v237
    %v239 = vand.u32 %v83, 4294901760
    %240 = vmatmul.f32.gmra.mxu0 %v239
    %v241 = vpop.f32.mrf.mxu0
    %v242 = vadd.f32 %v219, %v241
    %243 = vdwg.mxu0
    %vm244 = vcmp.ge.f32.partialorder %v242, 0.0
    %v245 = vmul.f32 %v242, 0.01
    %v246 = vsel %vm244, %v242, %v245
    %v247 = vld [vmem:[#allocation8] sm:$0xff]
    %v248 = vld [vmem:[#allocation8 + $0x8] sm:$0xff]
    %v249 = vld [vmem:[#allocation8 + $0x10] sm:$0xff]
    %v250 = vld [vmem:[#allocation8 + $0x18] sm:$0xff]
    %v251 = vld [vmem:[%s4] sm:$0x1]
    %v253 = vperm.slane %v251, 0
    %vm255 = vcmask 261120
    %v257 = vsel %vm255, %v246, 0
    %259 = vmatpush.msra.mxu0 0.0
    %260 = vmatpush.msra.mxu0 0.0
    %261 = vmatpush.msra.mxu0 0.0
    %262 = vmatpush.msra.mxu0 0.0
    %263 = vmatpush.msra.mxu0 0.0
    %264 = vmatpush.msra.mxu0 0.0
    %265 = vmatpush.msra.mxu0 0.0
    %266 = vmatpush.msra.mxu0 0.0
    %267 = vmatpush.msra.mxu0 0.0
    %268 = vmatpush.msra.mxu0 0.0
    %269 = vmatpush.msra.mxu0 0.0
    %270 = vmatpush.msra.mxu0 0.0
    %v271 = vand.u32 %v250, 4294901760
    %272 = vmatpush.msra.mxu0 %v271
    %v273 = vand.u32 %v249, 4294901760
    %274 = vmatpush.msra.mxu0 %v273
    %v275 = vand.u32 %v248, 4294901760
    %276 = vmatpush.msra.mxu0 %v275
    %v277 = vand.u32 %v247, 4294901760
    %278 = vmatpush.msra.mxu0 %v277
    %v279 = vand.u32 %v257, 4294901760
    %v280 = vsub.f32 %v257, %v279
    %v281 = vand.u32 %v280, 4294901760
    %v282 = vsub.f32 %v280, %v281
    %v283 = vand.u32 %v282, 4294901760
    %284 = vmatmul.f32.gmra.mxu0 %v283
    %v285 = vpop.f32.mrf.mxu0
    %v286 = vadd.f32 %v253, %v285
    %287 = vdwg.mxu0
    %288 = vmatpush.msra.mxu0 0.0
    %289 = vmatpush.msra.mxu0 0.0
    %290 = vmatpush.msra.mxu0 0.0
    %291 = vmatpush.msra.mxu0 0.0
    %292 = vmatpush.msra.mxu0 0.0
    %293 = vmatpush.msra.mxu0 0.0
    %294 = vmatpush.msra.mxu0 0.0
    %295 = vmatpush.msra.mxu0 0.0
    %296 = vmatpush.msra.mxu0 0.0
    %297 = vmatpush.msra.mxu0 0.0
    %298 = vmatpush.msra.mxu0 0.0
    %299 = vmatpush.msra.mxu0 0.0
    %v300 = vand.u32 %v250, 4294901760
    %v301 = vsub.f32 %v250, %v300
    %v302 = vand.u32 %v301, 4294901760
    %v303 = vsub.f32 %v301, %v302
    %v304 = vand.u32 %v303, 4294901760
    %305 = vmatpush.msra.mxu0 %v304
    %v306 = vand.u32 %v249, 4294901760
    %v307 = vsub.f32 %v249, %v306
    %v308 = vand.u32 %v307, 4294901760
    %v309 = vsub.f32 %v307, %v308
    %v310 = vand.u32 %v309, 4294901760
    %311 = vmatpush.msra.mxu0 %v310
    %v312 = vand.u32 %v248, 4294901760
    %v313 = vsub.f32 %v248, %v312
    %v314 = vand.u32 %v313, 4294901760
    %v315 = vsub.f32 %v313, %v314
    %v316 = vand.u32 %v315, 4294901760
    %317 = vmatpush.msra.mxu0 %v316
    %v318 = vand.u32 %v247, 4294901760
    %v319 = vsub.f32 %v247, %v318
    %v320 = vand.u32 %v319, 4294901760
    %v321 = vsub.f32 %v319, %v320
    %v322 = vand.u32 %v321, 4294901760
    %323 = vmatpush.msra.mxu0 %v322
    %v324 = vand.u32 %v257, 4294901760
    %325 = vmatmul.f32.gmra.mxu0 %v324
    %v326 = vpop.f32.mrf.mxu0
    %v327 = vadd.f32 %v286, %v326
    %328 = vdwg.mxu0
    %329 = vmatpush.msra.mxu0 0.0
    %330 = vmatpush.msra.mxu0 0.0
    %331 = vmatpush.msra.mxu0 0.0
    %332 = vmatpush.msra.mxu0 0.0
    %333 = vmatpush.msra.mxu0 0.0
    %334 = vmatpush.msra.mxu0 0.0
    %335 = vmatpush.msra.mxu0 0.0
    %336 = vmatpush.msra.mxu0 0.0
    %337 = vmatpush.msra.mxu0 0.0
    %338 = vmatpush.msra.mxu0 0.0
    %339 = vmatpush.msra.mxu0 0.0
    %340 = vmatpush.msra.mxu0 0.0
    %v341 = vand.u32 %v250, 4294901760
    %v342 = vsub.f32 %v250, %v341
    %343 = vmatpush.msra.mxu0 %v342
    %v344 = vand.u32 %v249, 4294901760
    %v345 = vsub.f32 %v249, %v344
    %346 = vmatpush.msra.mxu0 %v345
    %v347 = vand.u32 %v248, 4294901760
    %v348 = vsub.f32 %v248, %v347
    %349 = vmatpush.msra.mxu0 %v348
    %v350 = vand.u32 %v247, 4294901760
    %v351 = vsub.f32 %v247, %v350
    %352 = vmatpush.msra.mxu0 %v351
    %v353 = vand.u32 %v257, 4294901760
    %v354 = vsub.f32 %v257, %v353
    %355 = vmatmul.f32.gmra.mxu0 %v354
    %v356 = vpop.f32.mrf.mxu0
    %v357 = vadd.f32 %v327, %v356
    %358 = vdwg.mxu0
    %359 = vmatpush.msra.mxu0 0.0
    %360 = vmatpush.msra.mxu0 0.0
    %361 = vmatpush.msra.mxu0 0.0
    %362 = vmatpush.msra.mxu0 0.0
    %363 = vmatpush.msra.mxu0 0.0
    %364 = vmatpush.msra.mxu0 0.0
    %365 = vmatpush.msra.mxu0 0.0
    %366 = vmatpush.msra.mxu0 0.0
    %367 = vmatpush.msra.mxu0 0.0
    %368 = vmatpush.msra.mxu0 0.0
    %369 = vmatpush.msra.mxu0 0.0
    %370 = vmatpush.msra.mxu0 0.0
    %v371 = vand.u32 %v250, 4294901760
    %372 = vmatpush.msra.mxu0 %v371
    %v373 = vand.u32 %v249, 4294901760
    %374 = vmatpush.msra.mxu0 %v373
    %v375 = vand.u32 %v248, 4294901760
    %376 = vmatpush.msra.mxu0 %v375
    %v377 = vand.u32 %v247, 4294901760
    %378 = vmatpush.msra.mxu0 %v377
    %v379 = vand.u32 %v257, 4294901760
    %v380 = vsub.f32 %v257, %v379
    %v381 = vand.u32 %v380, 4294901760
    %382 = vmatmul.f32.gmra.mxu0 %v381
    %v383 = vpop.f32.mrf.mxu0
    %v384 = vadd.f32 %v357, %v383
    %385 = vdwg.mxu0
    %386 = vmatpush.msra.mxu0 0.0
    %387 = vmatpush.msra.mxu0 0.0
    %388 = vmatpush.msra.mxu0 0.0
    %389 = vmatpush.msra.mxu0 0.0
    %390 = vmatpush.msra.mxu0 0.0
    %391 = vmatpush.msra.mxu0 0.0
    %392 = vmatpush.msra.mxu0 0.0
    %393 = vmatpush.msra.mxu0 0.0
    %394 = vmatpush.msra.mxu0 0.0
    %395 = vmatpush.msra.mxu0 0.0
    %396 = vmatpush.msra.mxu0 0.0
    %397 = vmatpush.msra.mxu0 0.0
    %v398 = vand.u32 %v250, 4294901760
    %v399 = vsub.f32 %v250, %v398
    %v400 = vand.u32 %v399, 4294901760
    %401 = vmatpush.msra.mxu0 %v400
    %v402 = vand.u32 %v249, 4294901760
    %v403 = vsub.f32 %v249, %v402
    %v404 = vand.u32 %v403, 4294901760
    %405 = vmatpush.msra.mxu0 %v404
    %v406 = vand.u32 %v248, 4294901760
    %v407 = vsub.f32 %v248, %v406
    %v408 = vand.u32 %v407, 4294901760
    %409 = vmatpush.msra.mxu0 %v408
    %v410 = vand.u32 %v247, 4294901760
    %v411 = vsub.f32 %v247, %v410
    %v412 = vand.u32 %v411, 4294901760
    %413 = vmatpush.msra.mxu0 %v412
    %v414 = vand.u32 %v257, 4294901760
    %415 = vmatmul.f32.gmra.mxu0 %v414
    %v416 = vpop.f32.mrf.mxu0
    %v417 = vadd.f32 %v384, %v416
    %418 = vdwg.mxu0
    %419 = vmatpush.msra.mxu0 0.0
    %420 = vmatpush.msra.mxu0 0.0
    %421 = vmatpush.msra.mxu0 0.0
    %422 = vmatpush.msra.mxu0 0.0
    %423 = vmatpush.msra.mxu0 0.0
    %424 = vmatpush.msra.mxu0 0.0
    %425 = vmatpush.msra.mxu0 0.0
    %426 = vmatpush.msra.mxu0 0.0
    %427 = vmatpush.msra.mxu0 0.0
    %428 = vmatpush.msra.mxu0 0.0
    %429 = vmatpush.msra.mxu0 0.0
    %430 = vmatpush.msra.mxu0 0.0
    %v431 = vand.u32 %v250, 4294901760
    %432 = vmatpush.msra.mxu0 %v431
    %v433 = vand.u32 %v249, 4294901760
    %434 = vmatpush.msra.mxu0 %v433
    %v435 = vand.u32 %v248, 4294901760
    %436 = vmatpush.msra.mxu0 %v435
    %v437 = vand.u32 %v247, 4294901760
    %438 = vmatpush.msra.mxu0 %v437
    %v439 = vand.u32 %v257, 4294901760
    %440 = vmatmul.f32.gmra.mxu0 %v439
    %v441 = vpop.f32.mrf.mxu0
    %v442 = vadd.f32 %v417, %v441
    %443 = vdwg.mxu0
    %vm444 = vcmp.ge.f32.partialorder %v442, 0.0
    %v445 = vmul.f32 %v442, 0.01
    %v446 = vsel %vm444, %v442, %v445
    %v447 = vld [vmem:[%s5] sm:$0x1]
    %v448 = vld [vmem:[#allocation2] sm:$0x1]
    %450 = vset.pattern.permute.xlu0 0
    %451 = vperm.xlu0 %450, %v448
    %v452 = vpop.permute.xlu0 %451
    %v454 = vperm.slane %v452, 0
    %v456 = vsel %vm255, %v447, 0
    %v459 = vsel %vm255, %v446, 0
    %461 = vmatpush.xpose.msra.mxu0 0.0
    %462 = vmatpush.xpose.msra.mxu0 0.0
    %463 = vmatpush.xpose.msra.mxu0 0.0
    %464 = vmatpush.xpose.msra.mxu0 0.0
    %465 = vmatpush.xpose.msra.mxu0 0.0
    %466 = vmatpush.xpose.msra.mxu0 0.0
    %467 = vmatpush.xpose.msra.mxu0 0.0
    %468 = vmatpush.xpose.msra.mxu0 0.0
    %469 = vmatpush.xpose.msra.mxu0 0.0
    %470 = vmatpush.xpose.msra.mxu0 0.0
    %471 = vmatpush.xpose.msra.mxu0 0.0
    %472 = vmatpush.xpose.msra.mxu0 0.0
    %473 = vmatpush.xpose.msra.mxu0 0.0
    %474 = vmatpush.xpose.msra.mxu0 0.0
    %475 = vmatpush.xpose.msra.mxu0 0.0
    %v476 = vand.u32 %v459, 4294901760
    %477 = vmatpush.xpose.msra.mxu0 %v476
    %v478 = vand.u32 %v456, 4294901760
    %v479 = vsub.f32 %v456, %v478
    %v480 = vand.u32 %v479, 4294901760
    %v481 = vsub.f32 %v479, %v480
    %v482 = vand.u32 %v481, 4294901760
    %483 = vmatmul.f32.gmra.mxu0 %v482
    %v484 = vpop.f32.mrf.mxu0
    %v485 = vadd.f32 %v454, %v484
    %486 = vdwg.mxu0
    %487 = vmatpush.xpose.msra.mxu0 0.0
    %488 = vmatpush.xpose.msra.mxu0 0.0
    %489 = vmatpush.xpose.msra.mxu0 0.0
    %490 = vmatpush.xpose.msra.mxu0 0.0
    %491 = vmatpush.xpose.msra.mxu0 0.0
    %492 = vmatpush.xpose.msra.mxu0 0.0
    %493 = vmatpush.xpose.msra.mxu0 0.0
    %494 = vmatpush.xpose.msra.mxu0 0.0
    %495 = vmatpush.xpose.msra.mxu0 0.0
    %496 = vmatpush.xpose.msra.mxu0 0.0
    %497 = vmatpush.xpose.msra.mxu0 0.0
    %498 = vmatpush.xpose.msra.mxu0 0.0
    %499 = vmatpush.xpose.msra.mxu0 0.0
    %500 = vmatpush.xpose.msra.mxu0 0.0
    %501 = vmatpush.xpose.msra.mxu0 0.0
    %v502 = vand.u32 %v459, 4294901760
    %v503 = vsub.f32 %v459, %v502
    %v504 = vand.u32 %v503, 4294901760
    %v505 = vsub.f32 %v503, %v504
    %v506 = vand.u32 %v505, 4294901760
    %507 = vmatpush.xpose.msra.mxu0 %v506
    %v508 = vand.u32 %v456, 4294901760
    %509 = vmatmul.f32.gmra.mxu0 %v508
    %v510 = vpop.f32.mrf.mxu0
    %v511 = vadd.f32 %v485, %v510
    %512 = vdwg.mxu0
    %513 = vmatpush.xpose.msra.mxu0 0.0
    %514 = vmatpush.xpose.msra.mxu0 0.0
    %515 = vmatpush.xpose.msra.mxu0 0.0
    %516 = vmatpush.xpose.msra.mxu0 0.0
    %517 = vmatpush.xpose.msra.mxu0 0.0
    %518 = vmatpush.xpose.msra.mxu0 0.0
    %519 = vmatpush.xpose.msra.mxu0 0.0
    %520 = vmatpush.xpose.msra.mxu0 0.0
    %521 = vmatpush.xpose.msra.mxu0 0.0
    %522 = vmatpush.xpose.msra.mxu0 0.0
    %523 = vmatpush.xpose.msra.mxu0 0.0
    %524 = vmatpush.xpose.msra.mxu0 0.0
    %525 = vmatpush.xpose.msra.mxu0 0.0
    %526 = vmatpush.xpose.msra.mxu0 0.0
    %527 = vmatpush.xpose.msra.mxu0 0.0
    %v528 = vand.u32 %v459, 4294901760
    %v529 = vsub.f32 %v459, %v528
    %530 = vmatpush.xpose.msra.mxu0 %v529
    %v531 = vand.u32 %v456, 4294901760
    %v532 = vsub.f32 %v456, %v531
    %533 = vmatmul.f32.gmra.mxu0 %v532
    %v534 = vpop.f32.mrf.mxu0
    %v535 = vadd.f32 %v511, %v534
    %536 = vdwg.mxu0
    %537 = vmatpush.xpose.msra.mxu0 0.0
    %538 = vmatpush.xpose.msra.mxu0 0.0
    %539 = vmatpush.xpose.msra.mxu0 0.0
    %540 = vmatpush.xpose.msra.mxu0 0.0
    %541 = vmatpush.xpose.msra.mxu0 0.0
    %542 = vmatpush.xpose.msra.mxu0 0.0
    %543 = vmatpush.xpose.msra.mxu0 0.0
    %544 = vmatpush.xpose.msra.mxu0 0.0
    %545 = vmatpush.xpose.msra.mxu0 0.0
    %546 = vmatpush.xpose.msra.mxu0 0.0
    %547 = vmatpush.xpose.msra.mxu0 0.0
    %548 = vmatpush.xpose.msra.mxu0 0.0
    %549 = vmatpush.xpose.msra.mxu0 0.0
    %550 = vmatpush.xpose.msra.mxu0 0.0
    %551 = vmatpush.xpose.msra.mxu0 0.0
    %v552 = vand.u32 %v459, 4294901760
    %553 = vmatpush.xpose.msra.mxu0 %v552
    %v554 = vand.u32 %v456, 4294901760
    %v555 = vsub.f32 %v456, %v554
    %v556 = vand.u32 %v555, 4294901760
    %557 = vmatmul.f32.gmra.mxu0 %v556
    %v558 = vpop.f32.mrf.mxu0
    %v559 = vadd.f32 %v535, %v558
    %560 = vdwg.mxu0
    %561 = vmatpush.xpose.msra.mxu0 0.0
    %562 = vmatpush.xpose.msra.mxu0 0.0
    %563 = vmatpush.xpose.msra.mxu0 0.0
    %564 = vmatpush.xpose.msra.mxu0 0.0
    %565 = vmatpush.xpose.msra.mxu0 0.0
    %566 = vmatpush.xpose.msra.mxu0 0.0
    %567 = vmatpush.xpose.msra.mxu0 0.0
    %568 = vmatpush.xpose.msra.mxu0 0.0
    %569 = vmatpush.xpose.msra.mxu0 0.0
    %570 = vmatpush.xpose.msra.mxu0 0.0
    %571 = vmatpush.xpose.msra.mxu0 0.0
    %572 = vmatpush.xpose.msra.mxu0 0.0
    %573 = vmatpush.xpose.msra.mxu0 0.0
    %574 = vmatpush.xpose.msra.mxu0 0.0
    %575 = vmatpush.xpose.msra.mxu0 0.0
    %v576 = vand.u32 %v459, 4294901760
    %v577 = vsub.f32 %v459, %v576
    %v578 = vand.u32 %v577, 4294901760
    %579 = vmatpush.xpose.msra.mxu0 %v578
    %v580 = vand.u32 %v456, 4294901760
    %581 = vmatmul.f32.gmra.mxu0 %v580
    %v582 = vpop.f32.mrf.mxu0
    %v583 = vadd.f32 %v559, %v582
    %584 = vdwg.mxu0
    %585 = vmatpush.xpose.msra.mxu0 0.0
    %586 = vmatpush.xpose.msra.mxu0 0.0
    %587 = vmatpush.xpose.msra.mxu0 0.0
    %588 = vmatpush.xpose.msra.mxu0 0.0
    %589 = vmatpush.xpose.msra.mxu0 0.0
    %590 = vmatpush.xpose.msra.mxu0 0.0
    %591 = vmatpush.xpose.msra.mxu0 0.0
    %592 = vmatpush.xpose.msra.mxu0 0.0
    %593 = vmatpush.xpose.msra.mxu0 0.0
    %594 = vmatpush.xpose.msra.mxu0 0.0
    %595 = vmatpush.xpose.msra.mxu0 0.0
    %596 = vmatpush.xpose.msra.mxu0 0.0
    %597 = vmatpush.xpose.msra.mxu0 0.0
    %598 = vmatpush.xpose.msra.mxu0 0.0
    %599 = vmatpush.xpose.msra.mxu0 0.0
    %v600 = vand.u32 %v459, 4294901760
    %601 = vmatpush.xpose.msra.mxu0 %v600
    %v602 = vand.u32 %v456, 4294901760
    %603 = vmatmul.f32.gmra.mxu0 %v602
    %v604 = vpop.f32.mrf.mxu0
    %v605 = vadd.f32 %v583, %v604
    %606 = vdwg.mxu0
    %vm607 = vcmask 57344
    %608 = vst.msk [vmem:[#allocation9] sm:$0x1] %vm607, %v605
    // Predicated region
    $region42: #{tpu_custom_call.1} parent=1 // pred_check
      _
    $region43: #{tpu_custom_call.1} parent=1 // pred_check_branch
      %610 = sbr.rel (0) target = $region45
    $region44: #{tpu_custom_call.1} parent=1 // pred_region
      %612 = vsyncadd [#allocation5], 0
      %s614 = sshll.u32 [#allocation9], 4
      %s615 = int_to_ptr.vmem [resolvable:$true] %s614
      %s616 = sshll.u32 %s7, 4
      %s617 = int_to_ptr.hbm [resolvable:$true] %s616
      %619 = dma.vmem_to_hbm [thread:$0]  %s615, 16, %s617, [#allocation5]
    $region45: #{tpu_custom_call.1} parent=1 // pred_fallthru
      _
    // Predicated region
    $region46: #{tpu_custom_call.1} parent=1 // pred_check
      _
    $region47: #{tpu_custom_call.1} parent=1 // pred_check_branch
      %621 = sbr.rel (0) target = $region49
    $region48: #{tpu_custom_call.1} parent=1 // pred_region
      %623 = dma.done [#allocation5], 16
    $region49: #{tpu_custom_call.1} parent=1 // pred_fallthru
      _
    %624 = vsyncpa [#allocation4], 1
    %625 = vsyncpa [#allocation7], 1
    %626 = vsyncpa [#allocation5], 1

</llo_original>
